<compile_context>
chip_gen: v7x
topology: tpu7x:2x2x1
jax: 0.10.0
libtpu: 0.0.40
codegen_flags: <defaults>
</compile_context>

<pallas_src>
import jax
import jax.numpy as jnp
from jax.experimental import pallas as pl
from jax.experimental.pallas import tpu as pltpu


def _round_up(x, m):
    return (x + m - 1) // m * m


def time_embedding_kernel(t_ref, w1t_ref, b1_ref, w2t_ref, b2_ref, o_ref):
    # t_ref: (tm, 1) f32; w1t_ref/b1_ref: (1, Dp) f32; w2t_ref: (Dp, tn);
    # b2_ref: (1, tn) f32; o_ref: (tm, tn) f32.
    # Layer 1 + ReLU as one fused VPU expression (K=1 outer product == broadcast).
    h = jnp.maximum(t_ref[...] * w1t_ref[...] + b1_ref[...], 0.0)   # (tm, Dp) f32
    # Layer 2 on the MXU; w2 may be bf16, accumulate in f32.
    y = jnp.dot(h.astype(w2t_ref.dtype), w2t_ref[...],
                preferred_element_type=jnp.float32)                  # (tm, tn) f32
    o_ref[...] = (y + b2_ref[...]).astype(o_ref.dtype)


def prepare_time_embedding_params(w1, b1, w2, b2, *, w2_dtype=jnp.float32):
    """One-time prep (hoisted out of the hot path): transpose / pad / cast weights.

    PyTorch layouts: w1 (dim, 1), b1 (dim,), w2 (dim, dim), b2 (dim,).
    Use w2_dtype=jnp.bfloat16 to halve the dominant HBM stream (recommended on v5e).
    """
    dim = w1.shape[0]
    dim_pad = _round_up(dim, 128)

    w1t = jnp.zeros((1, dim_pad), jnp.float32).at[:, :dim].set(
        w1.reshape(1, dim).astype(jnp.float32))
    b1p = jnp.zeros((1, dim_pad), jnp.float32).at[:, :dim].set(
        b1.reshape(1, dim).astype(jnp.float32))
    w2t = jnp.zeros((dim_pad, dim_pad), w2_dtype).at[:dim, :dim].set(
        w2.T.astype(w2_dtype))
    b2p = jnp.zeros((1, dim_pad), jnp.float32).at[:, :dim].set(
        b2.reshape(1, dim).astype(jnp.float32))
    return {"dim": dim, "dim_pad": dim_pad,
            "w1t": w1t, "b1": b1p, "w2t": w2t, "b2": b2p}


def _vmem_budget_bytes():
    """Usable per-step VMEM budget, generation-aware (v7x: 64 MiB; v5e/v6e: 128 MiB)."""
    capacity = 64 << 20  # conservative fallback (v7x per-TC)
    try:
        info = pltpu.get_tpu_info()
        cap = getattr(info, "vmem_capacity_bytes", None)
        if cap:
            capacity = int(cap)
    except Exception:
        pass
    return int(0.70 * capacity)   # leave headroom for compiler scratch / spills


def _pick_tiles(B, dim_pad, w2_itemsize, vmem_budget):
    # Batch tile: single 8-aligned tile for small B, 256 rows otherwise
    # (matches the 256-wide MXU on v6e/v7x, amortizes per-step overhead).
    if B <= 256:
        tm = _round_up(B, 8)
    else:
        tm = 256
    B_pad = _round_up(B, tm)

    def step_bytes(tn):
        return (2 * (tm * 4                         # t tile (double-buffered)
                     + 2 * dim_pad * 4              # w1t + b1 full rows
                     + dim_pad * tn * w2_itemsize   # w2 column tile
                     + tn * 4                       # b2 tile
                     + tm * tn * 4)                 # output tile
                + 2 * tm * dim_pad * 4)             # h intermediate (+ cast headroom)

    # tn: largest multiple of 128 that divides dim_pad and fits the budget
    # (ideally tn == dim_pad so the j axis collapses to 1).
    candidates = [d for d in range(dim_pad, 127, -128) if dim_pad % d == 0]
    tn = candidates[-1]
    for d in candidates:
        if step_bytes(d) <= vmem_budget:
            tn = d
            break
    return tm, B_pad, tn, step_bytes(tn)


def time_embedding(t, params):
    """t: (B,) -> (B, dim); equivalent to mlp(t[:, None].float())."""
    dim = params["dim"]
    dim_pad = params["dim_pad"]
    w1t, b1, w2t, b2 = params["w1t"], params["b1"], params["w2t"], params["b2"]

    B = t.shape[0]
    w2_itemsize = jnp.dtype(w2t.dtype).itemsize
    vmem_budget = _vmem_budget_bytes()
    tm, B_pad, tn, step_bytes = _pick_tiles(B, dim_pad, w2_itemsize, vmem_budget)

    t2d = t.reshape(B, 1).astype(jnp.float32)
    if B_pad != B:
        t2d = jnp.zeros((B_pad, 1), jnp.float32).at[:B].set(t2d)

    # Grid: j (output-dim tile) is the OUTER / slow axis so the w2 block index
    # (0, j) is constant across the inner batch-tile sweep -> w2 streamed from
    # HBM exactly once.  Both axes are parallel (megacore shards the leading j
    # axis -> disjoint halves of the w2 stream on v7x).
    grid = (dim_pad // tn, B_pad // tm)

    vmem_limit = int(min(max(step_bytes + (4 << 20), 32 << 20), vmem_budget))
    vmem_limit = max(vmem_limit, step_bytes + (1 << 20))

    flops = 2 * B_pad * dim_pad * dim_pad + 4 * B_pad * dim_pad
    bytes_accessed = (t2d.size * 4 + w1t.size * 4 + b1.size * 4
                      + w2t.size * w2_itemsize + b2.size * 4
                      + B_pad * dim_pad * 4)

    out = pl.pallas_call(
        time_embedding_kernel,
        out_shape=jax.ShapeDtypeStruct((B_pad, dim_pad), jnp.float32),
        grid=grid,
        in_specs=[
            pl.BlockSpec((tm, 1), lambda j, i: (i, 0)),         # t
            pl.BlockSpec((1, dim_pad), lambda j, i: (0, 0)),    # w1^T (full row)
            pl.BlockSpec((1, dim_pad), lambda j, i: (0, 0)),    # b1   (full row)
            pl.BlockSpec((dim_pad, tn), lambda j, i: (0, j)),   # w2^T column tile
            pl.BlockSpec((1, tn), lambda j, i: (0, j)),         # b2 tile
        ],
        out_specs=pl.BlockSpec((tm, tn), lambda j, i: (i, j)),
        compiler_params=pltpu.CompilerParams(
            dimension_semantics=("parallel", "parallel"),
            vmem_limit_bytes=vmem_limit),
        cost_estimate=pl.CostEstimate(flops=flops, transcendentals=0,
                                      bytes_accessed=bytes_accessed),
    )(t2d, w1t, b1, w2t, b2)

    return out[:B, :dim]


def reference(t, w1, b1, w2, b2):
    x = t.reshape(-1, 1).astype(jnp.float32)
    h = jnp.maximum(x @ w1.T.astype(jnp.float32) + b1.astype(jnp.float32), 0.0)
    return (jnp.dot(h, w2.T.astype(jnp.float32),
                    precision=jax.lax.Precision.HIGHEST)
            + b2.astype(jnp.float32))


if __name__ == "__main__":
    key = jax.random.PRNGKey(0)
    k_t, k_w1, k_b1, k_w2, k_b2 = jax.random.split(key, 5)

    B, dim = 8, 32
    t = jax.random.uniform(k_t, (B,), jnp.float32, 0.0, 10.0)
    w1 = jax.random.normal(k_w1, (dim, 1), jnp.float32) * 0.5
    b1 = jax.random.normal(k_b1, (dim,), jnp.float32) * 0.1
    w2 = jax.random.normal(k_w2, (dim, dim), jnp.float32) * (1.0 / jnp.sqrt(dim))
    b2 = jax.random.normal(k_b2, (dim,), jnp.float32) * 0.1

    ref = reference(t, w1, b1, w2, b2)

    # f32 weights: tight tolerance.
    params_f32 = prepare_time_embedding_params(w1, b1, w2, b2, w2_dtype=jnp.float32)
    out = time_embedding(t, params_f32)
    jax.block_until_ready(out)
    assert out.shape == (B, dim)
    assert jnp.allclose(out, ref, atol=1e-4, rtol=1e-4), "f32 mismatch vs reference"

    # bf16 w2 (halves the dominant HBM stream; recommended on v5e): loosened tolerance.
    params_bf16 = prepare_time_embedding_params(w1, b1, w2, b2, w2_dtype=jnp.bfloat16)
    out_bf16 = time_embedding(t, params_bf16)
    jax.block_until_ready(out_bf16)
    assert out_bf16.shape == (B, dim)
    assert jnp.allclose(out_bf16, ref, atol=3e-2, rtol=3e-2), "bf16 mismatch vs reference"

    # Larger, non-aligned shape to exercise multi-tile grid + padding paths.
    k2 = jax.random.PRNGKey(1)
    k_t2, k_w12, k_b12, k_w22, k_b22 = jax.random.split(k2, 5)
    B2, dim2 = 300, 200
    t2 = jax.random.uniform(k_t2, (B2,), jnp.float32, 0.0, 10.0)
    w12 = jax.random.normal(k_w12, (dim2, 1), jnp.float32) * 0.5
    b12 = jax.random.normal(k_b12, (dim2,), jnp.float32) * 0.1
    w22 = jax.random.normal(k_w22, (dim2, dim2), jnp.float32) * (1.0 / jnp.sqrt(dim2))
    b22 = jax.random.normal(k_b22, (dim2,), jnp.float32) * 0.1
    params2 = prepare_time_embedding_params(w12, b12, w22, b22)
    out2 = time_embedding(t2, params2)
    jax.block_until_ready(out2)
    ref2 = reference(t2, w12, b12, w22, b22)
    assert out2.shape == (B2, dim2)
    assert jnp.allclose(out2, ref2, atol=2e-3, rtol=2e-3), "tiled f32 mismatch vs reference"

    print("KERNEL_OK")
</pallas_src>

<mosaic_0001>
module attributes {stable_mosaic.version = 11 : i64} {
  func.func @time_embedding_kernel(%arg0: i32, %arg1: i32, %arg2: memref<8x1xf32, #tpu.memory_space<vmem>>, %arg3: memref<1x128xf32, #tpu.memory_space<vmem>>, %arg4: memref<1x128xf32, #tpu.memory_space<vmem>>, %arg5: memref<128x128xf32, #tpu.memory_space<vmem>>, %arg6: memref<1x128xf32, #tpu.memory_space<vmem>>, %arg7: memref<8x128xf32, #tpu.memory_space<vmem>>) attributes {dimension_semantics = [#tpu.dimension_semantics<parallel>, #tpu.dimension_semantics<parallel>], iteration_bounds = array<i64: 1, 1>, scalar_prefetch = 0 : i64, scratch_operands = 0 : i64, tpu.core_type = #tpu.core_type<tc>, window_params = [{transform_indices = @transform_0, window_bounds = array<i64: 8, 1>}, {pipeline_mode = #tpu.pipeline_mode<synchronous>, transform_indices = @transform_1, window_bounds = array<i64: 1, 128>}, {pipeline_mode = #tpu.pipeline_mode<synchronous>, transform_indices = @transform_2, window_bounds = array<i64: 1, 128>}, {transform_indices = @transform_3, window_bounds = array<i64: 128, 128>}, {transform_indices = @transform_4, window_bounds = array<i64: 1, 128>}, {transform_indices = @transform_5, window_bounds = array<i64: 8, 128>}]} {
    %c0 = arith.constant 0 : index
    %c0_0 = arith.constant 0 : index
    %0 = vector.load %arg2[%c0, %c0_0] : memref<8x1xf32, #tpu.memory_space<vmem>>, vector<8x1xf32>
    %c0_1 = arith.constant 0 : index
    %c0_2 = arith.constant 0 : index
    %1 = vector.load %arg3[%c0_1, %c0_2] : memref<1x128xf32, #tpu.memory_space<vmem>>, vector<1x128xf32>
    %2 = vector.broadcast %0 : vector<8x1xf32> to vector<8x128xf32>
    %3 = vector.broadcast %1 : vector<1x128xf32> to vector<8x128xf32>
    %4 = arith.mulf %2, %3 : vector<8x128xf32>
    %c0_3 = arith.constant 0 : index
    %c0_4 = arith.constant 0 : index
    %5 = vector.load %arg4[%c0_3, %c0_4] : memref<1x128xf32, #tpu.memory_space<vmem>>, vector<1x128xf32>
    %6 = vector.broadcast %5 : vector<1x128xf32> to vector<8x128xf32>
    %7 = arith.addf %4, %6 : vector<8x128xf32>
    %cst = arith.constant 0.000000e+00 : f32
    %8 = vector.broadcast %cst : f32 to vector<8x128xf32>
    %9 = arith.maximumf %7, %8 : vector<8x128xf32>
    %c0_5 = arith.constant 0 : index
    %c0_6 = arith.constant 0 : index
    %10 = vector.load %arg5[%c0_5, %c0_6] : memref<128x128xf32, #tpu.memory_space<vmem>>, vector<128x128xf32>
    %cst_7 = arith.constant dense<0.000000e+00> : vector<8x128xf32>
    %11 = tpu.matmul %9, %10, %cst_7 {dimension_numbers = #tpu.dot_dimension_numbers<[1], [0], [0], [1], [0, 0, 1, 1], [], []>} : vector<8x128xf32>, vector<128x128xf32>, vector<8x128xf32> -> vector<8x128xf32>
    %c0_8 = arith.constant 0 : index
    %c0_9 = arith.constant 0 : index
    %12 = vector.load %arg6[%c0_8, %c0_9] : memref<1x128xf32, #tpu.memory_space<vmem>>, vector<1x128xf32>
    %13 = vector.broadcast %12 : vector<1x128xf32> to vector<8x128xf32>
    %14 = arith.addf %11, %13 : vector<8x128xf32>
    %c0_10 = arith.constant 0 : index
    %c0_11 = arith.constant 0 : index
    %15 = vector.load %arg7[%c0_10, %c0_11] : memref<8x128xf32, #tpu.memory_space<vmem>>, vector<8x128xf32>
    tpu.vector_store %arg7[%c0_10, %c0_11], %14 {strides = array<i32>} : memref<8x128xf32, #tpu.memory_space<vmem>>, vector<8x128xf32>,
    return
  }
  func.func @transform_0(%arg0: i32, %arg1: i32) -> (i32, i32) {
    %c0_i32 = arith.constant 0 : i32
    %c0_i32_0 = arith.constant 0 : i32
    return %arg1, %c0_i32 : i32, i32
  }
  func.func @transform_1(%arg0: i32, %arg1: i32) -> (i32, i32) {
    %c0_i32 = arith.constant 0 : i32
    %c0_i32_0 = arith.constant 0 : i32
    %c0_i32_1 = arith.constant 0 : i32
    return %c0_i32, %c0_i32_0 : i32, i32
  }
  func.func @transform_2(%arg0: i32, %arg1: i32) -> (i32, i32) {
    %c0_i32 = arith.constant 0 : i32
    %c0_i32_0 = arith.constant 0 : i32
    %c0_i32_1 = arith.constant 0 : i32
    return %c0_i32, %c0_i32_0 : i32, i32
  }
  func.func @transform_3(%arg0: i32, %arg1: i32) -> (i32, i32) {
    %c0_i32 = arith.constant 0 : i32
    %c0_i32_0 = arith.constant 0 : i32
    return %c0_i32, %arg0 : i32, i32
  }
  func.func @transform_4(%arg0: i32, %arg1: i32) -> (i32, i32) {
    %c0_i32 = arith.constant 0 : i32
    %c0_i32_0 = arith.constant 0 : i32
    return %c0_i32, %arg0 : i32, i32
  }
  func.func @transform_5(%arg0: i32, %arg1: i32) -> (i32, i32) {
    %c0_i32 = arith.constant 0 : i32
    return %arg1, %arg0 : i32, i32
  }
}

</mosaic_0001>

<llo_original>
// kernel: tpu_custom_call.1
$region0: #{tpu_custom_call.1}
  #allocation0 [shape = 'u32[]', space=smem, size = 0x4, offset = 0x4, fixed_abs, tag = 'smem constant byte address 0x4 - core index']
  #allocation1 [shape = 'u32[144,128]{1,0:T(1,128)}', space=vmem, size = 0x12000, scoped, tag = 'internal scratch']
  %s0 = inlined_call_operand.vmem [shape: f32[8,1], index: 0, kind: input, shape index: {}]
  %s1 = inlined_call_operand.vmem [shape: f32[1,128], index: 1, kind: input, shape index: {}]
  %s2 = inlined_call_operand.vmem [shape: f32[1,128], index: 2, kind: input, shape index: {}]
  %s3 = inlined_call_operand.hbm [shape: f32[128,128], index: 3, kind: input, shape index: {}]
  %s4 = inlined_call_operand.vmem [shape: f32[1,128], index: 4, kind: input, shape index: {}]
  %s5 = inlined_call_operand.hbm [shape: f32[8,128], index: 5, kind: output, shape index: {}]
  %s6 = sld [smem:[#allocation0]]
  $region34: #{tpu_custom_call.1} parent=0
    _
  %s8 = ssub.s32 1, %s6
  %s9 = scalar_select 0, %s8, %s6
  $region1: #{tpu_custom_call.1} parent=0
    #allocation2 [shape = 'u8[65536]{0}', space=vmem, size = 0x10000, scoped, tag = 'input window, operand 3, single buffered']
    #allocation3 [shape = 's32[1]{0}', space=sflag, size = 0x4, scoped, tag = 'scoped memory for tpu_custom_call.1']
    #allocation4 [shape = 's32[1]{0}', space=sflag, size = 0x4, scoped, tag = 'scoped memory for tpu_custom_call.1']
    #allocation5 [shape = 'u8[4096]{0}', space=vmem, size = 0x1000, scoped, tag = 'output window, operand 0, single buffered']
    %10 = vsyncpa [#allocation3], 0
    %11 = vsyncpa [#allocation4], 0
    // Predicated region
    $region2: #{tpu_custom_call.1} parent=1 // pred_check
      _
    $region3: #{tpu_custom_call.1} parent=1 // pred_check_branch
      %13 = sbr.rel (0) target = $region5
    $region4: #{tpu_custom_call.1} parent=1 // pred_region
      _
    $region5: #{tpu_custom_call.1} parent=1 // pred_fallthru
      _
    // Predicated region
    $region6: #{tpu_custom_call.1} parent=1 // pred_check
      _
    $region7: #{tpu_custom_call.1} parent=1 // pred_check_branch
      %15 = sbr.rel (0) target = $region9
    $region8: #{tpu_custom_call.1} parent=1 // pred_region
      _
    $region9: #{tpu_custom_call.1} parent=1 // pred_fallthru
      _
    // Predicated region
    $region10: #{tpu_custom_call.1} parent=1 // pred_check
      _
    $region11: #{tpu_custom_call.1} parent=1 // pred_check_branch
      %17 = sbr.rel (0) target = $region13
    $region12: #{tpu_custom_call.1} parent=1 // pred_region
      _
    $region13: #{tpu_custom_call.1} parent=1 // pred_fallthru
      _
    // Predicated region
    $region14: #{tpu_custom_call.1} parent=1 // pred_check
      _
    $region15: #{tpu_custom_call.1} parent=1 // pred_check_branch
      %19 = sbr.rel (0) target = $region17
    $region16: #{tpu_custom_call.1} parent=1 // pred_region
      %s21 = ssub.s32 2048, 2048
      %22 = vsyncadd [#allocation3], %s21
      %s23 = sshll.u32 [#allocation2], 4
      %s24 = int_to_ptr.vmem [resolvable:$true] %s23
      %29 = dma.hbm_to_vmem [thread:$0]  %s3, 2048, %s24, [#allocation3], 128, 128, 8
    $region17: #{tpu_custom_call.1} parent=1 // pred_fallthru
      _
    // Predicated region
    $region18: #{tpu_custom_call.1} parent=1 // pred_check
      _
    $region19: #{tpu_custom_call.1} parent=1 // pred_check_branch
      %31 = sbr.rel (0) target = $region21
    $region20: #{tpu_custom_call.1} parent=1 // pred_region
      _
    $region21: #{tpu_custom_call.1} parent=1 // pred_fallthru
      _
    // Predicated region
    $region22: #{tpu_custom_call.1} parent=1 // pred_check
      _
    $region23: #{tpu_custom_call.1} parent=1 // pred_check_branch
      %33 = sbr.rel (0) target = $region25
    $region24: #{tpu_custom_call.1} parent=1 // pred_region
      %34 = dma.done [#allocation3], 2048
    $region25: #{tpu_custom_call.1} parent=1 // pred_fallthru
      _
    %v35 = vld [vmem:[%s0] sm:$0xff]
    %v36 = vld [vmem:[%s1] sm:$0x1]
    %38 = vset.pattern.permute.xlu0 0
    %39 = vperm.xlu0 %38, %v35
    %v40 = vpop.permute.xlu0 %39
    %v43 = vlaneseq
    %v44 = vshrl.u32 %v43, 7
    %v45 = vsub.s32 0, %v44
    %v46 = vrot.slane %v36, %v45
    %v48 = vmul.f32 %v40, %v46
    %v49 = vld [vmem:[%s2] sm:$0x1]
    %v51 = vlaneseq
    %v52 = vshrl.u32 %v51, 7
    %v53 = vsub.s32 0, %v52
    %v54 = vrot.slane %v49, %v53
    %v56 = vadd.f32 %v48, %v54
    %v57 = vmax.f32 %v56, 0.0
    %v58 = vld [vmem:[#allocation2] sm:$0xff]
    %v59 = vld [vmem:[#allocation2 + $0x8] sm:$0xff]
    %v60 = vld [vmem:[#allocation2 + $0x10] sm:$0xff]
    %v61 = vld [vmem:[#allocation2 + $0x18] sm:$0xff]
    %v62 = vld [vmem:[#allocation2 + $0x20] sm:$0xff]
    %v63 = vld [vmem:[#allocation2 + $0x28] sm:$0xff]
    %v64 = vld [vmem:[#allocation2 + $0x30] sm:$0xff]
    %v65 = vld [vmem:[#allocation2 + $0x38] sm:$0xff]
    %v66 = vld [vmem:[#allocation2 + $0x40] sm:$0xff]
    %v67 = vld [vmem:[#allocation2 + $0x48] sm:$0xff]
    %v68 = vld [vmem:[#allocation2 + $0x50] sm:$0xff]
    %v69 = vld [vmem:[#allocation2 + $0x58] sm:$0xff]
    %v70 = vld [vmem:[#allocation2 + $0x60] sm:$0xff]
    %v71 = vld [vmem:[#allocation2 + $0x68] sm:$0xff]
    %v72 = vld [vmem:[#allocation2 + $0x70] sm:$0xff]
    %v73 = vld [vmem:[#allocation2 + $0x78] sm:$0xff]
    %v74 = vld [vmem:[%s4] sm:$0x1]
    %v76 = vlaneseq
    %v77 = vshrl.u32 %v76, 7
    %v78 = vsub.s32 0, %v77
    %v79 = vrot.slane %v74, %v78
    %81 = vmatprep.subr.mxu0 0.0
    %82 = vmatpush1.msra.mxu0 %v58
    %83 = vmatprep.subr.mxu0 0.0
    %84 = vmatpush1.msra.mxu0 %v59
    %85 = vmatprep.subr.mxu0 0.0
    %86 = vmatpush1.msra.mxu0 %v60
    %87 = vmatprep.subr.mxu0 0.0
    %88 = vmatpush1.msra.mxu0 %v61
    %89 = vmatprep.subr.mxu0 0.0
    %90 = vmatpush1.msra.mxu0 %v62
    %91 = vmatprep.subr.mxu0 0.0
    %92 = vmatpush1.msra.mxu0 %v63
    %93 = vmatprep.subr.mxu0 0.0
    %94 = vmatpush1.msra.mxu0 %v64
    %95 = vmatprep.subr.mxu0 0.0
    %96 = vmatpush1.msra.mxu0 %v65
    %97 = vmatprep.subr.mxu0 0.0
    %98 = vmatpush1.msra.mxu0 %v66
    %99 = vmatprep.subr.mxu0 0.0
    %100 = vmatpush1.msra.mxu0 %v67
    %101 = vmatprep.subr.mxu0 0.0
    %102 = vmatpush1.msra.mxu0 %v68
    %103 = vmatprep.subr.mxu0 0.0
    %104 = vmatpush1.msra.mxu0 %v69
    %105 = vmatprep.subr.mxu0 0.0
    %106 = vmatpush1.msra.mxu0 %v70
    %107 = vmatprep.subr.mxu0 0.0
    %108 = vmatpush1.msra.mxu0 %v71
    %109 = vmatprep.subr.mxu0 0.0
    %110 = vmatpush1.msra.mxu0 %v72
    %111 = vmatprep.subr.mxu0 0.0
    %112 = vmatpush1.msra.mxu0 %v73
    %113 = vmatprep.subr.mxu0 0.0
    %114 = vmatpush1.msra.mxu0 0.0
    %115 = vmatprep.subr.mxu0 0.0
    %116 = vmatpush1.msra.mxu0 0.0
    %117 = vmatprep.subr.mxu0 0.0
    %118 = vmatpush1.msra.mxu0 0.0
    %119 = vmatprep.subr.mxu0 0.0
    %120 = vmatpush1.msra.mxu0 0.0
    %121 = vmatprep.subr.mxu0 0.0
    %122 = vmatpush1.msra.mxu0 0.0
    %123 = vmatprep.subr.mxu0 0.0
    %124 = vmatpush1.msra.mxu0 0.0
    %125 = vmatprep.subr.mxu0 0.0
    %126 = vmatpush1.msra.mxu0 0.0
    %127 = vmatprep.subr.mxu0 0.0
    %128 = vmatpush1.msra.mxu0 0.0
    %129 = vmatprep.subr.mxu0 0.0
    %130 = vmatpush1.msra.mxu0 0.0
    %131 = vmatprep.subr.mxu0 0.0
    %132 = vmatpush1.msra.mxu0 0.0
    %133 = vmatprep.subr.mxu0 0.0
    %134 = vmatpush1.msra.mxu0 0.0
    %135 = vmatprep.subr.mxu0 0.0
    %136 = vmatpush1.msra.mxu0 0.0
    %137 = vmatprep.subr.mxu0 0.0
    %138 = vmatpush1.msra.mxu0 0.0
    %139 = vmatprep.subr.mxu0 0.0
    %140 = vmatpush1.msra.mxu0 0.0
    %141 = vmatprep.subr.mxu0 0.0
    %142 = vmatpush1.msra.mxu0 0.0
    %143 = vmatprep.subr.mxu0 0.0
    %144 = vmatpush1.msra.mxu0 0.0
    %145 = vmatprep.mubr.f32.mxu0 0.0
    %146 = vmatmul.mubr.f32.gmra.mrb[0].mxu0 %v57
    %v147 = vpop.f32.mrb[0].mxu0
    %v148 = vadd.f32 %v79, %v147
    %v149 = vpop.f32.mrb[0].mxu0
    %150 = vdwg.mxu0
    %151 = vst [vmem:[#allocation5] sm:$0xff] %v148
    // Predicated region
    $region26: #{tpu_custom_call.1} parent=1 // pred_check
      _
    $region27: #{tpu_custom_call.1} parent=1 // pred_check_branch
      %153 = sbr.rel (0) target = $region29
    $region28: #{tpu_custom_call.1} parent=1 // pred_region
      %s155 = ssub.s32 128, 128
      %156 = vsyncadd [#allocation4], %s155
      %s158 = sshll.u32 [#allocation5], 4
      %s159 = int_to_ptr.vmem [resolvable:$true] %s158
      %161 = dma.vmem_to_hbm [thread:$0]  %s159, 128, %s5, [#allocation4]
    $region29: #{tpu_custom_call.1} parent=1 // pred_fallthru
      _
    // Predicated region
    $region30: #{tpu_custom_call.1} parent=1 // pred_check
      _
    $region31: #{tpu_custom_call.1} parent=1 // pred_check_branch
      %163 = sbr.rel (0) target = $region33
    $region32: #{tpu_custom_call.1} parent=1 // pred_region
      %164 = dma.done [#allocation4], 128
    $region33: #{tpu_custom_call.1} parent=1 // pred_fallthru
      _
    %165 = vsyncpa [#allocation3], 1
    %166 = vsyncpa [#allocation4], 1

</llo_original>
